<compile_context>
chip_gen: v5e
topology: v5e:2x2
jax: 0.10.0
libtpu: 0.0.40
codegen_flags: <defaults>
</compile_context>

<pallas_src>
import functools

import jax
import jax.numpy as jnp
from jax.experimental import pallas as pl
from jax.experimental.pallas import tpu as pltpu


_LANE = 128                             # vreg lane width
_MAX_TILE_B = 8                         # one full sublane group per batch tile
_TARGET_BLOCK_BYTES = 4 * 1024 * 1024   # streaming tiles ~4 MiB
_JNP_FALLBACK_BYTES = 1 * 1024 * 1024   # below this, plain XLA fusion wins


def _round_up(x, m):
    return (x + m - 1) // m * m


def _vmem_limit_bytes():
    """Generation-aware scoped-VMEM budget (~3/4 of physical, capped)."""
    try:
        cap = int(pltpu.get_tpu_info().vmem_capacity_bytes)
    except Exception:                   # info unavailable -> conservative default
        cap = 64 * 1024 * 1024
    return max(32 * 1024 * 1024, min(cap * 3 // 4, 96 * 1024 * 1024))


def _compiler_params(sem, vmem_limit):
    return pltpu.CompilerParams(dimension_semantics=sem,
                                vmem_limit_bytes=vmem_limit)


# -----------------------------------------------------------------------------
# Kernels.  scale_ref / shift_ref are (1,) f32 scalar-prefetch refs in SMEM;
# x_ref / o_ref are lane-dense VMEM tiles.
# -----------------------------------------------------------------------------
def _affine_relu_kernel(scale_ref, shift_ref, x_ref, o_ref):
    """No-count branch: y = relu(x * scale + shift)."""
    o_ref[...] = jnp.maximum(x_ref[...] * scale_ref[0] + shift_ref[0], 0.0)


def _fused_count_kernel(scale_ref, shift_ref, cnt_ref, x_ref, o_ref,
                        *, n_valid, n_block):
    """Single-pass count branch: whole rows resident in one (tile_b, n_block) block.

    Stages y through o_ref so only ~4x block of VMEM is live (in + out,
    double-buffered) -- no extra block-sized temporaries.
    """
    o_ref[...] = jnp.maximum(x_ref[...] * scale_ref[0] + shift_ref[0], 0.0)
    y = o_ref[...]
    if n_valid != n_block:
        # Zero the lane tail before the reduction (relu(shift) may be > 0 and
        # the tail lanes hold uninitialized VMEM).
        col = jax.lax.broadcasted_iota(jnp.int32, y.shape, 1)
        y = jnp.where(col < n_valid, y, 0.0)
    s = jnp.maximum(jnp.sum(y, axis=-1, keepdims=True), 1e-6)   # XLU lane reduce
    inv = pl.reciprocal(s, approx=True)                          # EUP reciprocal
    inv = inv * (2.0 - s * inv)                                  # one Newton step
    o_ref[...] = o_ref[...] * (cnt_ref[...] * inv)


def _rowsum_kernel(scale_ref, shift_ref, x_ref, sum_ref,
                   *, n_valid, tile_n, mask_tail):
    """Two-pass count branch, pass 1: accumulate per-row sums of relu(ax+b).

    sum_ref is lane-dense (tile_b, 128): every lane carries the row sum so the
    writeback is an unmasked vst.
    """
    j = pl.program_id(1)

    @pl.when(j == 0)
    def _():
        sum_ref[...] = jnp.zeros_like(sum_ref)

    y = jnp.maximum(x_ref[...] * scale_ref[0] + shift_ref[0], 0.0)
    if mask_tail:
        col = j * tile_n + jax.lax.broadcasted_iota(jnp.int32, y.shape, 1)
        y = jnp.where(col < n_valid, y, 0.0)
    sum_ref[...] += jnp.sum(y, axis=-1, keepdims=True)


def _rescale_kernel(scale_ref, shift_ref, cnt_ref, sum_ref, x_ref, o_ref):
    """Two-pass count branch, pass 2: recompute relu(ax+b), apply cnt/sum in-kernel."""
    s = jnp.maximum(sum_ref[:, 0:1], 1e-6)
    inv = pl.reciprocal(s, approx=True)
    inv = inv * (2.0 - s * inv)
    y = jnp.maximum(x_ref[...] * scale_ref[0] + shift_ref[0], 0.0)
    o_ref[...] = y * (cnt_ref[...] * inv)


# -----------------------------------------------------------------------------
# Wrapper
# -----------------------------------------------------------------------------
def multi_scale_processor(density_map, density_scale, density_shift, count=None,
                          *, force_two_pass=False, small_input_fallback=True):
    """Pallas equivalent of the density post-processing forward.

    density_map: (B, C, H, W) float32
    density_scale / density_shift: scalar parameters
    count: optional (B,) or (B, 1) per-sample target sums.
    """
    B, C, H, W = density_map.shape
    N = C * H * W

    x = density_map.reshape(B, N).astype(jnp.float32)
    scale = jnp.asarray(density_scale, jnp.float32)
    shift = jnp.asarray(density_shift, jnp.float32)
    cnt = None if count is None else jnp.asarray(count, jnp.float32).reshape(B, 1)

    # ---- tiny inputs: a fused XLA elementwise beats pallas_call dispatch ----
    if small_input_fallback and not force_two_pass and B * N * 4 <= _JNP_FALLBACK_BYTES:
        y = jnp.maximum(x * scale + shift, 0.0)
        if cnt is not None:
            s = jnp.maximum(jnp.sum(y, axis=-1, keepdims=True), 1e-6)
            y = y * (cnt / s)
        return y.reshape(B, C, H, W)

    vmem_limit = _vmem_limit_bytes()
    scale1, shift1 = scale.reshape(1), shift.reshape(1)

    n128 = _round_up(N, _LANE)
    # Batch tile: the (8, 128) block rule forces tile_b in {B, multiples of 8}.
    tile_b = B if B <= _MAX_TILE_B else _MAX_TILE_B
    nb = pl.cdiv(B, tile_b)
    out_sd = jax.ShapeDtypeStruct((B, N), jnp.float32)

    # Streaming tile width: ~4 MiB blocks; exact output shape, no pre-padding.
    tile_n = min(n128, max(_LANE, (_TARGET_BLOCK_BYTES // (tile_b * 4)) // _LANE * _LANE))
    if nb == 1 and pl.cdiv(N, tile_n) == 1 and n128 >= 2 * _LANE:
        # Single-step grids idle v7x's second TensorCore: split the lane axis.
        tile_n = _round_up(n128 // 2, _LANE)
    nn = pl.cdiv(N, tile_n)

    tile_spec = pl.BlockSpec((tile_b, tile_n), lambda i, j, *_: (i, j))
    cnt_spec2d = pl.BlockSpec((tile_b, 1), lambda i, j, *_: (i, 0))
    sum_spec = pl.BlockSpec((tile_b, _LANE), lambda i, j, *_: (i, 0))

    if cnt is None:
        out = pl.pallas_call(
            _affine_relu_kernel,
            out_shape=out_sd,
            grid_spec=pltpu.PrefetchScalarGridSpec(
                num_scalar_prefetch=2, grid=(nb, nn),
                in_specs=[tile_spec], out_specs=tile_spec),
            compiler_params=_compiler_params(("parallel", "parallel"), vmem_limit),
        )(scale1, shift1, x)
        return out.reshape(B, C, H, W)

    # Count branch: fused single pass (2N HBM traffic) whenever whole rows fit
    # residency under the VMEM budget (~5x block covers in + out double-buffered
    # plus slack), otherwise a streaming two-pass fallback (3N traffic).
    row_bytes = n128 * 4
    if not force_two_pass and 5 * tile_b * row_bytes <= vmem_limit:
        full_spec = pl.BlockSpec((tile_b, n128), lambda i, *_: (i, 0))
        cnt_spec1d = pl.BlockSpec((tile_b, 1), lambda i, *_: (i, 0))
        out = pl.pallas_call(
            functools.partial(_fused_count_kernel, n_valid=N, n_block=n128),
            out_shape=out_sd,
            grid_spec=pltpu.PrefetchScalarGridSpec(
                num_scalar_prefetch=2, grid=(nb,),
                in_specs=[cnt_spec1d, full_spec], out_specs=full_spec),
            compiler_params=_compiler_params(("parallel",), vmem_limit),
        )(scale1, shift1, cnt, x)
    else:
        sums = pl.pallas_call(
            functools.partial(_rowsum_kernel, n_valid=N, tile_n=tile_n,
                              mask_tail=(N % tile_n != 0)),
            out_shape=jax.ShapeDtypeStruct((B, _LANE), jnp.float32),
            grid_spec=pltpu.PrefetchScalarGridSpec(
                num_scalar_prefetch=2, grid=(nb, nn),
                in_specs=[tile_spec], out_specs=sum_spec),
            compiler_params=_compiler_params(("parallel", "arbitrary"), vmem_limit),
        )(scale1, shift1, x)
        out = pl.pallas_call(
            _rescale_kernel,
            out_shape=out_sd,
            grid_spec=pltpu.PrefetchScalarGridSpec(
                num_scalar_prefetch=2, grid=(nb, nn),
                in_specs=[cnt_spec2d, sum_spec, tile_spec], out_specs=tile_spec),
            compiler_params=_compiler_params(("parallel", "parallel"), vmem_limit),
        )(scale1, shift1, cnt, sums, x)

    return out.reshape(B, C, H, W)


# -----------------------------------------------------------------------------
# Reference (pure JAX) for verification
# -----------------------------------------------------------------------------
def _reference(density_map, scale, shift, count=None):
    y = jnp.maximum(density_map.astype(jnp.float32) * scale + shift, 0.0)
    if count is None:
        return y
    s = jnp.maximum(jnp.sum(y, axis=(1, 2, 3)), 1e-6)
    factor = jnp.asarray(count, jnp.float32).reshape(-1) / s
    return y * factor[:, None, None, None]


if __name__ == "__main__":
    key = jax.random.PRNGKey(0)
    k1, k2, k3, k4 = jax.random.split(key, 4)

    density_scale = jnp.float32(1.3)
    density_shift = jnp.float32(0.05)

    # Case 1: lane-aligned N (4*16*16 = 1024): fused single-pass count path.
    B, C, H, W = 2, 4, 16, 16
    dm = jax.random.normal(k1, (B, C, H, W), dtype=jnp.float32)
    cnt = jax.random.uniform(k2, (B, 1), dtype=jnp.float32) * 100.0 + 1.0
    ref = _reference(dm, density_scale, density_shift, cnt)

    out_fused = jax.block_until_ready(
        multi_scale_processor(dm, density_scale, density_shift, cnt,
                              small_input_fallback=False))
    assert jnp.allclose(out_fused, ref, atol=1e-4, rtol=1e-4), "fused count mismatch"

    # Same inputs through the streaming two-pass path.
    out_2p = jax.block_until_ready(
        multi_scale_processor(dm, density_scale, density_shift, cnt,
                              force_two_pass=True, small_input_fallback=False))
    assert jnp.allclose(out_2p, ref, atol=1e-4, rtol=1e-4), "two-pass count mismatch"

    # No-count streaming branch.
    ref_nc = _reference(dm, density_scale, density_shift, None)
    out_nc = jax.block_until_ready(
        multi_scale_processor(dm, density_scale, density_shift, None,
                              small_input_fallback=False))
    assert jnp.allclose(out_nc, ref_nc, atol=1e-5, rtol=1e-5), "no-count mismatch"

    # Tiny-input jnp fallback (default behaviour) should agree too.
    out_fb = jax.block_until_ready(
        multi_scale_processor(dm, density_scale, density_shift, cnt))
    assert jnp.allclose(out_fb, ref, atol=1e-4, rtol=1e-4), "fallback mismatch"

    # Case 2: non-128-multiple N (3*10*10 = 300), odd batch: ragged lane tail
    # handled in-kernel (no pre-pad / post-slice).
    B2, C2, H2, W2 = 3, 3, 10, 10
    dm2 = jax.random.normal(k3, (B2, C2, H2, W2), dtype=jnp.float32)
    cnt2 = jax.random.uniform(k4, (B2,), dtype=jnp.float32) * 50.0 + 1.0
    ref2 = _reference(dm2, density_scale, density_shift, cnt2)

    out2 = jax.block_until_ready(
        multi_scale_processor(dm2, density_scale, density_shift, cnt2,
                              small_input_fallback=False))
    assert jnp.allclose(out2, ref2, atol=1e-4, rtol=1e-4), "ragged fused mismatch"

    out2_2p = jax.block_until_ready(
        multi_scale_processor(dm2, density_scale, density_shift, cnt2,
                              force_two_pass=True, small_input_fallback=False))
    assert jnp.allclose(out2_2p, ref2, atol=1e-4, rtol=1e-4), "ragged two-pass mismatch"

    out2_nc = jax.block_until_ready(
        multi_scale_processor(dm2, density_scale, density_shift, None,
                              small_input_fallback=False))
    assert jnp.allclose(out2_nc, _reference(dm2, density_scale, density_shift, None),
                        atol=1e-5, rtol=1e-5), "ragged no-count mismatch"

    print("KERNEL_OK")
</pallas_src>

<mosaic_0001>
module attributes {stable_mosaic.version = 11 : i64} {
  func.func @_fused_count_kernel(%arg0: i32, %arg1: memref<1xf32, #tpu.memory_space<smem>>, %arg2: memref<1xf32, #tpu.memory_space<smem>>, %arg3: memref<2x1xf32, #tpu.memory_space<vmem>>, %arg4: memref<2x1024xf32, #tpu.memory_space<vmem>>, %arg5: memref<2x1024xf32, #tpu.memory_space<vmem>>) attributes {dimension_semantics = [#tpu.dimension_semantics<parallel>], iteration_bounds = array<i64: 1>, scalar_prefetch = 2 : i64, scratch_operands = 0 : i64, tpu.core_type = #tpu.core_type<tc>, window_params = [{transform_indices = @transform_0, window_bounds = array<i64: 2, 1>}, {transform_indices = @transform_1, window_bounds = array<i64: 2, 1024>}, {transform_indices = @transform_2, window_bounds = array<i64: 2, 1024>}]} {
    %c0 = arith.constant 0 : index
    %c0_0 = arith.constant 0 : index
    %0 = vector.load %arg4[%c0, %c0_0] : memref<2x1024xf32, #tpu.memory_space<vmem>>, vector<2x1024xf32>
    %c0_1 = arith.constant 0 : index
    %1 = memref.load %arg1[%c0_1] : memref<1xf32, #tpu.memory_space<smem>>
    %2 = vector.broadcast %1 : f32 to vector<2x1024xf32>
    %3 = arith.mulf %0, %2 : vector<2x1024xf32>
    %c0_2 = arith.constant 0 : index
    %4 = memref.load %arg2[%c0_2] : memref<1xf32, #tpu.memory_space<smem>>
    %5 = vector.broadcast %4 : f32 to vector<2x1024xf32>
    %6 = arith.addf %3, %5 : vector<2x1024xf32>
    %cst = arith.constant 0.000000e+00 : f32
    %7 = vector.broadcast %cst : f32 to vector<2x1024xf32>
    %8 = arith.maximumf %6, %7 : vector<2x1024xf32>
    %c0_3 = arith.constant 0 : index
    %c0_4 = arith.constant 0 : index
    %9 = vector.load %arg5[%c0_3, %c0_4] : memref<2x1024xf32, #tpu.memory_space<vmem>>, vector<2x1024xf32>
    tpu.vector_store %arg5[%c0_3, %c0_4], %8 {strides = array<i32>} : memref<2x1024xf32, #tpu.memory_space<vmem>>, vector<2x1024xf32>,
    %c0_5 = arith.constant 0 : index
    %c0_6 = arith.constant 0 : index
    %10 = vector.load %arg5[%c0_5, %c0_6] : memref<2x1024xf32, #tpu.memory_space<vmem>>, vector<2x1024xf32>
    %cst_7 = arith.constant dense<0.000000e+00> : vector<2xf32>
    %11 = vector.multi_reduction <add>, %10, %cst_7 [1] : vector<2x1024xf32> to vector<2xf32>
    %12 = vector.shape_cast %11 : vector<2xf32> to vector<2x1xf32>
    %cst_8 = arith.constant 9.99999997E-7 : f32
    %13 = vector.broadcast %cst_8 : f32 to vector<2x1xf32>
    %14 = arith.maximumf %12, %13 : vector<2x1xf32>
    %15 = tpu.reciprocal %14 {approx = true} : vector<2x1xf32> -> vector<2x1xf32>
    %16 = arith.mulf %14, %15 : vector<2x1xf32>
    %cst_9 = arith.constant 2.000000e+00 : f32
    %17 = vector.broadcast %cst_9 : f32 to vector<2x1xf32>
    %18 = arith.subf %17, %16 : vector<2x1xf32>
    %19 = arith.mulf %15, %18 : vector<2x1xf32>
    %c0_10 = arith.constant 0 : index
    %c0_11 = arith.constant 0 : index
    %20 = vector.load %arg5[%c0_10, %c0_11] : memref<2x1024xf32, #tpu.memory_space<vmem>>, vector<2x1024xf32>
    %c0_12 = arith.constant 0 : index
    %c0_13 = arith.constant 0 : index
    %21 = vector.load %arg3[%c0_12, %c0_13] : memref<2x1xf32, #tpu.memory_space<vmem>>, vector<2x1xf32>
    %22 = arith.mulf %21, %19 : vector<2x1xf32>
    %23 = vector.broadcast %22 : vector<2x1xf32> to vector<2x1024xf32>
    %24 = arith.mulf %20, %23 : vector<2x1024xf32>
    %c0_14 = arith.constant 0 : index
    %c0_15 = arith.constant 0 : index
    %25 = vector.load %arg5[%c0_14, %c0_15] : memref<2x1024xf32, #tpu.memory_space<vmem>>, vector<2x1024xf32>
    tpu.vector_store %arg5[%c0_14, %c0_15], %24 {strides = array<i32>} : memref<2x1024xf32, #tpu.memory_space<vmem>>, vector<2x1024xf32>,
    return
  }
  func.func @transform_0(%arg0: i32, %arg1: memref<1xf32, #tpu.memory_space<smem>>, %arg2: memref<1xf32, #tpu.memory_space<smem>>) -> (i32, i32) {
    %c0_i32 = arith.constant 0 : i32
    %c0_i32_0 = arith.constant 0 : i32
    return %arg0, %c0_i32 : i32, i32
  }
  func.func @transform_1(%arg0: i32, %arg1: memref<1xf32, #tpu.memory_space<smem>>, %arg2: memref<1xf32, #tpu.memory_space<smem>>) -> (i32, i32) {
    %c0_i32 = arith.constant 0 : i32
    %c0_i32_0 = arith.constant 0 : i32
    return %arg0, %c0_i32 : i32, i32
  }
  func.func @transform_2(%arg0: i32, %arg1: memref<1xf32, #tpu.memory_space<smem>>, %arg2: memref<1xf32, #tpu.memory_space<smem>>) -> (i32, i32) {
    %c0_i32 = arith.constant 0 : i32
    %c0_i32_0 = arith.constant 0 : i32
    return %arg0, %c0_i32 : i32, i32
  }
}

</mosaic_0001>

<llo_original>
// kernel: tpu_custom_call.1
$region0: #{tpu_custom_call.1}
  #allocation0 [shape = 'u32[]', space=smem, size = 0x4, offset = 0x4, fixed_abs, tag = 'smem constant byte address 0x4 - core index']
  #allocation1 [shape = 'u32[72,128]{1,0:T(1,128)}', space=vmem, size = 0x9000, scoped, tag = 'internal scratch']
  #allocation2 [shape = 's32[1]{0}', space=sflag, size = 0x4, scoped, tag = 'scoped memory for tpu_custom_call.1']
  #allocation3 [shape = 'f32[1]{0:T(128)S(6)}', space=smem, size = 0x200, scoped, tag = 'prefetched SMEM operand 0']
  #allocation4 [shape = 'f32[1]{0:T(128)S(6)}', space=smem, size = 0x200, scoped, tag = 'prefetched SMEM operand 1']
  %s0 = inlined_call_operand.<no memory space> [shape: f32[1], index: 0, kind: input, shape index: {}]
  %s1 = inlined_call_operand.<no memory space> [shape: f32[1], index: 1, kind: input, shape index: {}]
  %s2 = inlined_call_operand.vmem [shape: f32[2,1], index: 2, kind: input, shape index: {}]
  %s3 = inlined_call_operand.hbm [shape: f32[2,1024], index: 3, kind: input, shape index: {}]
  %s4 = inlined_call_operand.hbm [shape: f32[2,1024], index: 4, kind: output, shape index: {}]
  %s5 = sld [smem:[#allocation0]]
  $region22: #{tpu_custom_call.1} parent=0
    _
  %s7 = ssub.s32 1, %s5
  %s8 = scalar_select 0, %s7, %s5
  %9 = sst [smem:[#allocation3]] %s0
  %10 = sst [smem:[#allocation4]] %s1
  $region1: #{tpu_custom_call.1} parent=0
    #allocation5 [shape = 'u8[8192]{0}', space=vmem, size = 0x2000, scoped, tag = 'input window, operand 3, single buffered']
    #allocation6 [shape = 's32[1]{0}', space=sflag, size = 0x4, scoped, tag = 'scoped memory for tpu_custom_call.1']
    #allocation7 [shape = 's32[1]{0}', space=sflag, size = 0x4, scoped, tag = 'scoped memory for tpu_custom_call.1']
    #allocation8 [shape = 'u8[8192]{0}', space=vmem, size = 0x2000, scoped, tag = 'output window, operand 0, single buffered']
    %11 = vsyncpa [#allocation6], 0
    %12 = vsyncpa [#allocation7], 0
    // Predicated region
    $region2: #{tpu_custom_call.1} parent=1 // pred_check
      _
    $region3: #{tpu_custom_call.1} parent=1 // pred_check_branch
      %14 = sbr.rel (0) target = $region5
    $region4: #{tpu_custom_call.1} parent=1 // pred_region
      _
    $region5: #{tpu_custom_call.1} parent=1 // pred_fallthru
      _
    // Predicated region
    $region6: #{tpu_custom_call.1} parent=1 // pred_check
      _
    $region7: #{tpu_custom_call.1} parent=1 // pred_check_branch
      %16 = sbr.rel (0) target = $region9
    $region8: #{tpu_custom_call.1} parent=1 // pred_region
      %18 = vsyncadd [#allocation6], 0
      %s20 = sshll.u32 %s3, 4
      %s21 = int_to_ptr.hbm [resolvable:$true] %s20
      %s22 = sshll.u32 [#allocation5], 4
      %s23 = int_to_ptr.vmem [resolvable:$true] %s22
      %25 = dma.hbm_to_vmem [thread:$0]  %s21, 256, %s23, [#allocation6]
    $region9: #{tpu_custom_call.1} parent=1 // pred_fallthru
      _
    // Predicated region
    $region10: #{tpu_custom_call.1} parent=1 // pred_check
      _
    $region11: #{tpu_custom_call.1} parent=1 // pred_check_branch
      %27 = sbr.rel (0) target = $region13
    $region12: #{tpu_custom_call.1} parent=1 // pred_region
      %29 = dma.done [#allocation6], 256
    $region13: #{tpu_custom_call.1} parent=1 // pred_fallthru
      _
    %v30 = vld [vmem:[#allocation5] sm:$0xff]
    %v31 = vld [vmem:[#allocation5 + $0x8] sm:$0xff]
    %s32 = sld [smem:[#allocation3]]
    %v33 = vstv %s32
    %v34 = vmul.f32 %v30, %v33
    %v35 = vmul.f32 %v31, %v33
    %s36 = sld [smem:[#allocation4]]
    %v37 = vstv %s36
    %v38 = vadd.f32 %v34, %v37
    %v39 = vadd.f32 %v35, %v37
    %v40 = vmax.f32 %v38, 0.0
    %v41 = vmax.f32 %v39, 0.0
    %42 = vst [vmem:[#allocation8] sm:$0xff] %v40
    %43 = vst [vmem:[#allocation8 + $0x8] sm:$0xff] %v41
    %v44 = vld [vmem:[#allocation8] sm:$0xff]
    %v45 = vld [vmem:[#allocation8 + $0x8] sm:$0xff]
    %48 = vst [vmem:[#allocation1] ss:$4 sm:$0xff] %v44
    %s49 = scalar_lea.vmem [#allocation1], 32
    %50 = vst [vmem:[%s49] ss:$4 sm:$0xff] %v45
    %v51 = vld.sshfl [vmem:[#allocation1] sm:$0xff pattern:$0x73625140]
    %v52 = vld.sshfl [vmem:[#allocation1 + $0x8] sm:$0xff pattern:$0x73625140]
    %v53 = vld.sshfl [vmem:[#allocation1 + $0x10] sm:$0xff pattern:$0x73625140]
    %v54 = vld.sshfl [vmem:[#allocation1 + $0x18] sm:$0xff pattern:$0x73625140]
    %v55 = vld.sshfl [vmem:[#allocation1 + $0x20] sm:$0xff pattern:$0x73625140]
    %v56 = vld.sshfl [vmem:[#allocation1 + $0x28] sm:$0xff pattern:$0x73625140]
    %v57 = vld.sshfl [vmem:[#allocation1 + $0x30] sm:$0xff pattern:$0x73625140]
    %v58 = vld.sshfl [vmem:[#allocation1 + $0x38] sm:$0xff pattern:$0x73625140]
    %vm67 = vcmask 1041408
    %v68 = vsel %vm67, %v51, 0.0
    %v69 = vsel %vm67, %v52, 0.0
    %v70 = vadd.f32 %v68, %v69
    %v71 = vsel %vm67, %v53, 0.0
    %v72 = vadd.f32 %v70, %v71
    %v73 = vsel %vm67, %v54, 0.0
    %v74 = vadd.f32 %v72, %v73
    %v75 = vsel %vm67, %v55, 0.0
    %v76 = vadd.f32 %v74, %v75
    %v77 = vsel %vm67, %v56, 0.0
    %v78 = vadd.f32 %v76, %v77
    %v79 = vsel %vm67, %v57, 0.0
    %v80 = vadd.f32 %v78, %v79
    %v81 = vsel %vm67, %v58, 0.0
    %v82 = vadd.f32 %v80, %v81
    %83 = vadd.xlane.f32.xlu0 %v82
    %v84 = vpop.xlane.xlu0 %83
    %v85 = vmax.f32 %v84, 1e-06
    %v86 = vrcp.pop %v85
    %v87 = vmul.f32 %v85, %v86
    %v88 = vsub.f32 2.0, %v87
    %v89 = vmul.f32 %v86, %v88
    %v90 = vld [vmem:[%s2] sm:$0x3]
    %v91 = vmul.f32 %v90, %v89
    %93 = vset.pattern.permute.xlu0 0
    %94 = vperm.xlu0 %93, %v91
    %v95 = vpop.permute.xlu0 %94
    %v97 = vunpack.c.l.s4 269488144
    %v98 = vunpack.c.0.s8 %v97
    %v99 = vperm.slane %v95, %v98
    %v101 = vmul.f32 %v44, %v99
    %v102 = vmul.f32 %v45, %v99
    %103 = vst [vmem:[#allocation8] sm:$0xff] %v101
    %104 = vst [vmem:[#allocation8 + $0x8] sm:$0xff] %v102
    // Predicated region
    $region14: #{tpu_custom_call.1} parent=1 // pred_check
      _
    $region15: #{tpu_custom_call.1} parent=1 // pred_check_branch
      %106 = sbr.rel (0) target = $region17
    $region16: #{tpu_custom_call.1} parent=1 // pred_region
      %108 = vsyncadd [#allocation7], 0
      %s110 = sshll.u32 [#allocation8], 4
      %s111 = int_to_ptr.vmem [resolvable:$true] %s110
      %s112 = sshll.u32 %s4, 4
      %s113 = int_to_ptr.hbm [resolvable:$true] %s112
      %115 = dma.vmem_to_hbm [thread:$0]  %s111, 256, %s113, [#allocation7]
    $region17: #{tpu_custom_call.1} parent=1 // pred_fallthru
      _
    // Predicated region
    $region18: #{tpu_custom_call.1} parent=1 // pred_check
      _
    $region19: #{tpu_custom_call.1} parent=1 // pred_check_branch
      %117 = sbr.rel (0) target = $region21
    $region20: #{tpu_custom_call.1} parent=1 // pred_region
      %119 = dma.done [#allocation7], 256
    $region21: #{tpu_custom_call.1} parent=1 // pred_fallthru
      _
    %120 = vsyncpa [#allocation6], 1
    %121 = vsyncpa [#allocation7], 1

</llo_original>
